<compile_context>
chip_gen: v7x
topology: tpu7x:2x2x1
jax: 0.10.0
libtpu: 0.0.40
codegen_flags: <defaults>
</compile_context>

<pallas_src>
import functools

import jax
import jax.numpy as jnp
from jax.experimental import pallas as pl
from jax.experimental.pallas import tpu as pltpu

_MIB = 1024 * 1024


def _round_up(x, m):
    return ((x + m - 1) // m) * m


def _halve_tile(t):
    return max(128, _round_up(t // 2, 128))


def _affine_kernel_single_k(x_ref, w_ref, b_ref, o_ref, *, apply_relu):
    """Whole K in one block: no accumulator scratch, no K grid axis."""
    out = jnp.dot(x_ref[...], w_ref[...], preferred_element_type=jnp.float32)
    out = out + b_ref[...].astype(jnp.float32)   # bias broadcast over (1, tn)
    if apply_relu:
        out = jnp.maximum(out, 0.0)
    o_ref[...] = out.astype(o_ref.dtype)


def _affine_kernel_multi_k(x_ref, w_ref, b_ref, o_ref, acc_ref, *, apply_relu):
    """One (tm, tn) output tile, accumulating over the innermost K grid axis."""
    k = pl.program_id(2)

    @pl.when(k == 0)
    def _():
        acc_ref[...] = jnp.zeros_like(acc_ref)

    acc_ref[...] += jnp.dot(
        x_ref[...], w_ref[...], preferred_element_type=jnp.float32
    )

    @pl.when(k == pl.num_programs(2) - 1)
    def _():
        out = acc_ref[...] + b_ref[...].astype(jnp.float32)
        if apply_relu:
            out = jnp.maximum(out, 0.0)
        o_ref[...] = out.astype(o_ref.dtype)


def _physical_vmem_bytes():
    """Best-effort query of per-core VMEM capacity; conservative fallback."""
    try:
        info = pltpu.get_tpu_info()
        cap = getattr(info, "vmem_capacity_bytes", None)
        if cap:
            return int(cap)
    except Exception:
        pass
    return 64 * _MIB   # v7x-sized (smallest current generation) fallback


def _working_set_bytes(tm, tn, tk, in_itemsize, out_itemsize, with_acc):
    # Double-buffered x / W / bias input tiles + output tile, plus the f32
    # accumulator scratch in the K-split case.
    ws = 2 * ((tm * tk + tk * tn + tn) * in_itemsize + tm * tn * out_itemsize)
    if with_acc:
        ws += tm * tn * 4
    return ws


def _choose_tiles(M, N, K, in_itemsize, out_itemsize, vmem_budget_bytes):
    """Pick (tm, tn, tk, single_k) sized against the VMEM budget.

    tm/tn never exceed the true dims (full-dim blocks are always legal and
    avoid pushing dead rows/cols through the MXU for skinny shapes); large
    dims are capped at 512 and shrunk by halves (128-aligned) until the
    double-buffered working set fits.
    """
    tm0 = M if M <= 512 else 512
    tn0 = N if N <= 512 else 512

    def shrink(tm_, tn_, tk_, with_acc):
        while (_working_set_bytes(tm_, tn_, tk_, in_itemsize, out_itemsize,
                                  with_acc) > vmem_budget_bytes
               and max(tm_, tn_) > 128):
            if tn_ >= tm_ and tn_ > 128:
                tn_ = _halve_tile(tn_)
            else:
                tm_ = _halve_tile(tm_)
        return tm_, tn_

    # Preferred: whole K in one block (no accumulator, no K grid axis).
    tm1, tn1 = shrink(tm0, tn0, K, False)
    if _working_set_bytes(tm1, tn1, K, in_itemsize, out_itemsize,
                          False) <= vmem_budget_bytes:
        return tm1, tn1, K, True

    # K-split path: f32 accumulator scratch, K as the innermost grid axis.
    tk = min(_round_up(K, 128), 2048)
    while (_working_set_bytes(tm0, tn0, tk, in_itemsize, out_itemsize,
                              True) > vmem_budget_bytes and tk > 128):
        tk = _halve_tile(tk)
    tm2, tn2 = shrink(tm0, tn0, tk, True)
    return tm2, tn2, tk, False


def affine_pallas(inp, W, b, *, linear=False, compute_dtype="auto", tiles=None,
                  vmem_budget_bytes=None):
    """Pallas-TPU equivalent of Affine.forward.

    Args:
      inp: [bsize, maxlen, i_dim] (default path) or [rows, i_dim] (linear=True).
      W:   [i_dim, o_dim]
      b:   [o_dim]
      linear: if True, skip the ReLU (torch.mm branch).
      compute_dtype: dtype fed to the MXU. "auto" (default) uses bfloat16 for
        float32 inputs (f32 accumulation kept, output cast back to the input
        dtype); pass jnp.float32 for full-f32 compute or None to keep the
        input dtype.
      tiles: optional (tm, tn, tk) override (mainly for testing).
      vmem_budget_bytes: optional override of the tile working-set budget.
    Returns: same leading dims as `inp`, last dim = o_dim, dtype of `inp`.
    """
    orig_dtype = inp.dtype
    orig_lead = inp.shape[:-1]
    i_dim, o_dim = W.shape
    x2d = inp.reshape(-1, i_dim)
    M, K = x2d.shape
    N = o_dim

    if isinstance(compute_dtype, str) and compute_dtype == "auto":
        compute_dtype = jnp.bfloat16 if orig_dtype == jnp.float32 else None
    if compute_dtype is not None and x2d.dtype != compute_dtype:
        # NOTE: for repeated calls with the same weights, cast W once outside
        # the hot path (or rely on XLA constant-folding it under jit).
        x2d = x2d.astype(compute_dtype)
        W = W.astype(compute_dtype)

    in_itemsize = jnp.dtype(x2d.dtype).itemsize
    out_itemsize = jnp.dtype(orig_dtype).itemsize

    phys_vmem = _physical_vmem_bytes()
    if vmem_budget_bytes is None:
        # ~45% of physical VMEM: ~28 MiB on v7x (64 MiB VMEM), ~57 MiB on
        # v5e/v6e (128 MiB); leaves headroom for Pallas-internal scratch.
        vmem_budget_bytes = int(phys_vmem * 0.45)

    if tiles is None:
        tm, tn, tk, single_k = _choose_tiles(
            M, N, K, in_itemsize, out_itemsize, vmem_budget_bytes)
    else:
        tm, tn, tk = tiles
        tm, tn = min(tm, M), min(tn, N)
        single_k = tk >= K
        if single_k:
            tk = K

    # v7x shards "parallel" grid axes across its 2 TensorCores; if the whole
    # problem collapsed to one parallel block, split it so both cores get work
    # (harmless extra grid step on single-core chips).
    if pl.cdiv(M, tm) * pl.cdiv(N, tn) == 1:
        if tn >= 256:
            tn = _halve_tile(tn)
        elif tm >= 256:
            tm = _halve_tile(tm)

    apply_relu = not linear
    b2d = b.reshape(1, N)

    ws = _working_set_bytes(tm, tn, K if single_k else tk,
                            in_itemsize, out_itemsize, not single_k)
    vmem_limit = int(min(phys_vmem * 0.9, max(32 * _MIB, ws + 8 * _MIB)))

    if single_k:
        # Single K block: no accumulator scratch, 2-D parallel grid.
        kernel = functools.partial(_affine_kernel_single_k,
                                   apply_relu=apply_relu)
        out2d = pl.pallas_call(
            kernel,
            out_shape=jax.ShapeDtypeStruct((M, N), orig_dtype),
            grid_spec=pltpu.PrefetchScalarGridSpec(
                num_scalar_prefetch=0,
                grid=(pl.cdiv(M, tm), pl.cdiv(N, tn)),
                in_specs=[
                    pl.BlockSpec((tm, K), lambda i, j: (i, 0)),   # x panel
                    pl.BlockSpec((K, tn), lambda i, j: (0, j)),   # W panel
                    pl.BlockSpec((1, tn), lambda i, j: (0, j)),   # bias
                ],
                out_specs=pl.BlockSpec((tm, tn), lambda i, j: (i, j)),
            ),
            compiler_params=pltpu.CompilerParams(
                dimension_semantics=("parallel", "parallel"),
                vmem_limit_bytes=vmem_limit),
        )(x2d, W, b2d)
    else:
        # K split: pad x and W with zeros along K only if tk does not divide K
        # so out-of-range K columns contribute exactly zero to the accumulator.
        K_pad = _round_up(K, tk)
        if K_pad != K:
            x2d = jnp.pad(x2d, ((0, 0), (0, K_pad - K)))
            W = jnp.pad(W, ((0, K_pad - K), (0, 0)))

        kernel = functools.partial(_affine_kernel_multi_k,
                                   apply_relu=apply_relu)
        out2d = pl.pallas_call(
            kernel,
            out_shape=jax.ShapeDtypeStruct((M, N), orig_dtype),
            grid_spec=pltpu.PrefetchScalarGridSpec(
                num_scalar_prefetch=0,
                grid=(pl.cdiv(M, tm), pl.cdiv(N, tn), K_pad // tk),
                in_specs=[
                    pl.BlockSpec((tm, tk), lambda i, j, k: (i, k)),   # x tile
                    pl.BlockSpec((tk, tn), lambda i, j, k: (k, j)),   # W tile
                    pl.BlockSpec((1, tn), lambda i, j, k: (0, j)),    # bias
                ],
                out_specs=pl.BlockSpec((tm, tn), lambda i, j, k: (i, j)),
                scratch_shapes=[pltpu.VMEM((tm, tn), jnp.float32)],
            ),
            compiler_params=pltpu.CompilerParams(
                dimension_semantics=("parallel", "parallel", "arbitrary"),
                vmem_limit_bytes=vmem_limit),
        )(x2d, W, b2d)

    return out2d.reshape(*orig_lead, N)


def init_affine_params(key, i_dim, o_dim, dtype=jnp.float32):
    """Deterministic init matching the PyTorch module's shapes.

    W: xavier_normal_ -> N(0, sqrt(2/(i_dim+o_dim)))
    b: uniform_       -> U[0, 1)
    """
    kw, kb = jax.random.split(key)
    std = (2.0 / (i_dim + o_dim)) ** 0.5
    W = (jax.random.normal(kw, (i_dim, o_dim), dtype=jnp.float32) * std).astype(dtype)
    b = jax.random.uniform(kb, (o_dim,), dtype=jnp.float32).astype(dtype)
    return W, b


if __name__ == "__main__":
    key = jax.random.PRNGKey(0)
    k_x, k_p, k_x2, k_p2 = jax.random.split(key, 4)

    # Small shapes consistent with the module: [bsize, maxlen, emb] -> hid.
    bsize, maxlen, emb_size, hid_size = 2, 8, 32, 32
    x = jax.random.normal(k_x, (bsize, maxlen, emb_size), dtype=jnp.float32)
    W, b = init_affine_params(k_p, emb_size, hid_size)

    # Default path: relu(x @ W + b), auto-bf16 MXU compute, f32 accumulate.
    out = affine_pallas(x, W, b, linear=False)
    jax.block_until_ready(out)
    xq = x.astype(jnp.bfloat16).astype(jnp.float32)
    Wq = W.astype(jnp.bfloat16).astype(jnp.float32)
    ref_bf16 = jnp.maximum(jnp.matmul(xq, Wq) + b, 0.0)
    assert out.shape == (bsize, maxlen, hid_size)
    assert out.dtype == x.dtype
    assert jnp.allclose(out, ref_bf16, atol=1e-3, rtol=1e-3)

    # Full-f32 compute path (matches the torch f32 reference tightly).
    out_f32 = affine_pallas(x, W, b, linear=False, compute_dtype=jnp.float32)
    jax.block_until_ready(out_f32)
    ref = jnp.maximum(jnp.matmul(x, W) + b, 0.0)
    assert jnp.allclose(out_f32, ref, atol=1e-4, rtol=1e-4)

    # linear=True path on a 2-D input (torch.mm branch, no ReLU).
    x2d = x.reshape(-1, emb_size)
    out_lin = affine_pallas(x2d, W, b, linear=True, compute_dtype=jnp.float32)
    jax.block_until_ready(out_lin)
    ref_lin = jnp.matmul(x2d, W) + b
    assert out_lin.shape == (bsize * maxlen, hid_size)
    assert jnp.allclose(out_lin, ref_lin, atol=1e-4, rtol=1e-4)

    # Exercise the K-split (accumulator) path by forcing small tiles.
    emb2, hid2 = 256, 128
    x_big = jax.random.normal(k_x2, (bsize, maxlen, emb2), dtype=jnp.float32)
    W2, b2 = init_affine_params(k_p2, emb2, hid2)
    out2 = affine_pallas(x_big, W2, b2, linear=False,
                         compute_dtype=jnp.float32, tiles=(16, 128, 128))
    jax.block_until_ready(out2)
    ref2 = jnp.maximum(jnp.matmul(x_big, W2) + b2, 0.0)
    assert out2.shape == (bsize, maxlen, hid2)
    assert jnp.allclose(out2, ref2, atol=1e-4, rtol=1e-4)

    print("KERNEL_OK")
</pallas_src>

<mosaic_0001>
module attributes {stable_mosaic.version = 11 : i64} {
  func.func @_affine_kernel_single_k(%arg0: i32, %arg1: i32, %arg2: memref<16x32xbf16, #tpu.memory_space<vmem>>, %arg3: memref<32x32xbf16, #tpu.memory_space<vmem>>, %arg4: memref<1x32xf32, #tpu.memory_space<vmem>>, %arg5: memref<16x32xf32, #tpu.memory_space<vmem>>) attributes {dimension_semantics = [#tpu.dimension_semantics<parallel>, #tpu.dimension_semantics<parallel>], iteration_bounds = array<i64: 1, 1>, scalar_prefetch = 0 : i64, scratch_operands = 0 : i64, tpu.core_type = #tpu.core_type<tc>, window_params = [{transform_indices = @transform_0, window_bounds = array<i64: 16, 32>}, {transform_indices = @transform_1, window_bounds = array<i64: 32, 32>}, {transform_indices = @transform_2, window_bounds = array<i64: 1, 32>}, {transform_indices = @transform_3, window_bounds = array<i64: 16, 32>}]} {
    %c0 = arith.constant 0 : index
    %c0_0 = arith.constant 0 : index
    %0 = vector.load %arg2[%c0, %c0_0] : memref<16x32xbf16, #tpu.memory_space<vmem>>, vector<16x32xbf16>
    %c0_1 = arith.constant 0 : index
    %c0_2 = arith.constant 0 : index
    %1 = vector.load %arg3[%c0_1, %c0_2] : memref<32x32xbf16, #tpu.memory_space<vmem>>, vector<32x32xbf16>
    %cst = arith.constant dense<0.000000e+00> : vector<16x32xf32>
    %2 = tpu.matmul %0, %1, %cst {dimension_numbers = #tpu.dot_dimension_numbers<[1], [0], [0], [1], [0, 0, 1, 1], [], []>} : vector<16x32xbf16>, vector<32x32xbf16>, vector<16x32xf32> -> vector<16x32xf32>
    %c0_3 = arith.constant 0 : index
    %c0_4 = arith.constant 0 : index
    %3 = vector.load %arg4[%c0_3, %c0_4] : memref<1x32xf32, #tpu.memory_space<vmem>>, vector<1x32xf32>
    %4 = vector.broadcast %3 : vector<1x32xf32> to vector<16x32xf32>
    %5 = arith.addf %2, %4 : vector<16x32xf32>
    %cst_5 = arith.constant 0.000000e+00 : f32
    %6 = vector.broadcast %cst_5 : f32 to vector<16x32xf32>
    %7 = arith.maximumf %5, %6 : vector<16x32xf32>
    %c0_6 = arith.constant 0 : index
    %c0_7 = arith.constant 0 : index
    %8 = vector.load %arg5[%c0_6, %c0_7] : memref<16x32xf32, #tpu.memory_space<vmem>>, vector<16x32xf32>
    tpu.vector_store %arg5[%c0_6, %c0_7], %7 {strides = array<i32>} : memref<16x32xf32, #tpu.memory_space<vmem>>, vector<16x32xf32>,
    return
  }
  func.func @transform_0(%arg0: i32, %arg1: i32) -> (i32, i32) {
    %c0_i32 = arith.constant 0 : i32
    %c0_i32_0 = arith.constant 0 : i32
    return %arg0, %c0_i32 : i32, i32
  }
  func.func @transform_1(%arg0: i32, %arg1: i32) -> (i32, i32) {
    %c0_i32 = arith.constant 0 : i32
    %c0_i32_0 = arith.constant 0 : i32
    return %c0_i32, %arg1 : i32, i32
  }
  func.func @transform_2(%arg0: i32, %arg1: i32) -> (i32, i32) {
    %c0_i32 = arith.constant 0 : i32
    %c0_i32_0 = arith.constant 0 : i32
    return %c0_i32, %arg1 : i32, i32
  }
  func.func @transform_3(%arg0: i32, %arg1: i32) -> (i32, i32) {
    %c0_i32 = arith.constant 0 : i32
    return %arg0, %arg1 : i32, i32
  }
}

</mosaic_0001>

<llo_original>
// kernel: tpu_custom_call.1
$region0: #{tpu_custom_call.1}
  #allocation0 [shape = 'u32[]', space=smem, size = 0x4, offset = 0x4, fixed_abs, tag = 'smem constant byte address 0x4 - core index']
  #allocation1 [shape = 'u32[144,128]{1,0:T(1,128)}', space=vmem, size = 0x12000, scoped, tag = 'internal scratch']
  %s0 = inlined_call_operand.hbm [shape: bf16[16,32], index: 0, kind: input, shape index: {}]
  %s1 = inlined_call_operand.hbm [shape: bf16[32,32], index: 1, kind: input, shape index: {}]
  %s2 = inlined_call_operand.vmem [shape: f32[1,32], index: 2, kind: input, shape index: {}]
  %s3 = inlined_call_operand.hbm [shape: f32[16,32], index: 3, kind: output, shape index: {}]
  %s4 = sld [smem:[#allocation0]]
  $region30: #{tpu_custom_call.1} parent=0
    _
  %s6 = ssub.s32 1, %s4
  %s7 = scalar_select 0, %s6, %s4
  $region1: #{tpu_custom_call.1} parent=0
    #allocation2 [shape = 'u8[4096]{0}', space=vmem, size = 0x1000, scoped, tag = 'input window, operand 0, single buffered']
    #allocation3 [shape = 's32[1]{0}', space=sflag, size = 0x4, scoped, tag = 'scoped memory for tpu_custom_call.1']
    #allocation4 [shape = 's32[1]{0}', space=sflag, size = 0x4, scoped, tag = 'scoped memory for tpu_custom_call.1']
    #allocation5 [shape = 'u8[8192]{0}', space=vmem, size = 0x2000, scoped, tag = 'input window, operand 1, single buffered']
    #allocation6 [shape = 's32[1]{0}', space=sflag, size = 0x4, scoped, tag = 'scoped memory for tpu_custom_call.1']
    #allocation7 [shape = 'u8[8192]{0}', space=vmem, size = 0x2000, scoped, tag = 'output window, operand 0, single buffered']
    %8 = vsyncpa [#allocation3], 0
    %9 = vsyncpa [#allocation6], 0
    %10 = vsyncpa [#allocation4], 0
    // Predicated region
    $region2: #{tpu_custom_call.1} parent=1 // pred_check
      _
    $region3: #{tpu_custom_call.1} parent=1 // pred_check_branch
      %12 = sbr.rel (0) target = $region5
    $region4: #{tpu_custom_call.1} parent=1 // pred_region
      %s14 = ssub.s32 128, 128
      %15 = vsyncadd [#allocation3], %s14
      %s16 = sshll.u32 [#allocation2], 4
      %s17 = int_to_ptr.vmem [resolvable:$true] %s16
      %22 = dma.hbm_to_vmem [thread:$0]  %s0, 128, %s17, [#allocation3], 64, 64, 4
    $region5: #{tpu_custom_call.1} parent=1 // pred_fallthru
      _
    // Predicated region
    $region6: #{tpu_custom_call.1} parent=1 // pred_check
      _
    $region7: #{tpu_custom_call.1} parent=1 // pred_check_branch
      %24 = sbr.rel (0) target = $region9
    $region8: #{tpu_custom_call.1} parent=1 // pred_region
      %s26 = ssub.s32 256, 256
      %27 = vsyncadd [#allocation6], %s26
      %s28 = sshll.u32 [#allocation5], 4
      %s29 = int_to_ptr.vmem [resolvable:$true] %s28
      %34 = dma.hbm_to_vmem [thread:$0]  %s1, 256, %s29, [#allocation6], 64, 64, 4
    $region9: #{tpu_custom_call.1} parent=1 // pred_fallthru
      _
    // Predicated region
    $region10: #{tpu_custom_call.1} parent=1 // pred_check
      _
    $region11: #{tpu_custom_call.1} parent=1 // pred_check_branch
      %36 = sbr.rel (0) target = $region13
    $region12: #{tpu_custom_call.1} parent=1 // pred_region
      _
    $region13: #{tpu_custom_call.1} parent=1 // pred_fallthru
      _
    // Predicated region
    $region14: #{tpu_custom_call.1} parent=1 // pred_check
      _
    $region15: #{tpu_custom_call.1} parent=1 // pred_check_branch
      %38 = sbr.rel (0) target = $region17
    $region16: #{tpu_custom_call.1} parent=1 // pred_region
      %39 = dma.done [#allocation3], 128
    $region17: #{tpu_custom_call.1} parent=1 // pred_fallthru
      _
    // Predicated region
    $region18: #{tpu_custom_call.1} parent=1 // pred_check
      _
    $region19: #{tpu_custom_call.1} parent=1 // pred_check_branch
      %41 = sbr.rel (0) target = $region21
    $region20: #{tpu_custom_call.1} parent=1 // pred_region
      %42 = dma.done [#allocation6], 256
    $region21: #{tpu_custom_call.1} parent=1 // pred_fallthru
      _
    %v44 = vld [vmem:[#allocation2] sm:$0xf]
    %v45 = vld [vmem:[#allocation2 + $0x4] sm:$0xf]
    %v46 = vld [vmem:[#allocation5] sm:$0xf]
    %v47 = vld [vmem:[#allocation5 + $0x4] sm:$0xf]
    %v48 = vld [vmem:[#allocation5 + $0x8] sm:$0xf]
    %v49 = vld [vmem:[#allocation5 + $0xc] sm:$0xf]
    %v50 = vld [vmem:[%s2] sm:$0x1]
    %v52 = vlaneseq
    %v53 = vshrl.u32 %v52, 7
    %v54 = vsub.s32 0, %v53
    %v55 = vrot.slane %v50, %v54
    %v59 = vunpack.c.l.b16 %v44
    %v60 = vunpack.c.l.b16 %v45
    %v61 = vpack.c.b16 %v60, %v59
    %v66 = vunpack.c.l.b16 %v46
    %v67 = vunpack.c.l.b16 %v47
    %v68 = vunpack.c.l.b16 %v48
    %v69 = vunpack.c.l.b16 %v49
    %v70 = vpack.c.b16 %v67, %v66
    %v71 = vpack.c.b16 %v69, %v68
    %vm74 = vcmask 261120
    %v76 = vsel %vm74, %v61, 0
    %78 = vmatprep.subr.bf16.mxu0 0
    %79 = vmatpush1.bf16.msra.mxu0 %v70
    %80 = vmatprep.subr.bf16.mxu0 0
    %81 = vmatpush1.bf16.msra.mxu0 %v71
    %82 = vmatprep.subr.bf16.mxu0 0
    %83 = vmatpush1.bf16.msra.mxu0 0
    %84 = vmatprep.subr.bf16.mxu0 0
    %85 = vmatpush1.bf16.msra.mxu0 0
    %86 = vmatprep.subr.bf16.mxu0 0
    %87 = vmatpush1.bf16.msra.mxu0 0
    %88 = vmatprep.subr.bf16.mxu0 0
    %89 = vmatpush1.bf16.msra.mxu0 0
    %90 = vmatprep.subr.bf16.mxu0 0
    %91 = vmatpush1.bf16.msra.mxu0 0
    %92 = vmatprep.subr.bf16.mxu0 0
    %93 = vmatpush1.bf16.msra.mxu0 0
    %94 = vmatprep.subr.bf16.mxu0 0
    %95 = vmatpush1.bf16.msra.mxu0 0
    %96 = vmatprep.subr.bf16.mxu0 0
    %97 = vmatpush1.bf16.msra.mxu0 0
    %98 = vmatprep.subr.bf16.mxu0 0
    %99 = vmatpush1.bf16.msra.mxu0 0
    %100 = vmatprep.subr.bf16.mxu0 0
    %101 = vmatpush1.bf16.msra.mxu0 0
    %102 = vmatprep.subr.bf16.mxu0 0
    %103 = vmatpush1.bf16.msra.mxu0 0
    %104 = vmatprep.subr.bf16.mxu0 0
    %105 = vmatpush1.bf16.msra.mxu0 0
    %106 = vmatprep.subr.bf16.mxu0 0
    %107 = vmatpush1.bf16.msra.mxu0 0
    %108 = vmatprep.subr.bf16.mxu0 0
    %109 = vmatpush1.bf16.msra.mxu0 0
    %110 = vmatprep.mubr.bf16.mxu0 0
    %111 = vmatmul.mubr.bf16.gmra.mrb[0].mxu0 %v76
    %v112 = vpop.f32.mrb[0].mxu0
    %v113 = vadd.f32 %v55, %v112
    %v114 = vpop.f32.mrb[0].mxu0
    %v115 = vpop.f32.mrb[0].mxu0
    %v116 = vadd.f32 %v55, %v115
    %v117 = vpop.f32.mrb[0].mxu0
    %118 = vdwg.mxu0
    %v119 = vmax.f32 %v113, 0.0
    %v120 = vmax.f32 %v116, 0.0
    %121 = vst.msk [vmem:[#allocation7] sm:$0xff] %vm74, %v119
    %122 = vst.msk [vmem:[#allocation7 + $0x8] sm:$0xff] %vm74, %v120
    // Predicated region
    $region22: #{tpu_custom_call.1} parent=1 // pred_check
      _
    $region23: #{tpu_custom_call.1} parent=1 // pred_check_branch
      %124 = sbr.rel (0) target = $region25
    $region24: #{tpu_custom_call.1} parent=1 // pred_region
      %s126 = ssub.s32 256, 256
      %127 = vsyncadd [#allocation4], %s126
      %s128 = sshll.u32 [#allocation7], 4
      %s129 = int_to_ptr.vmem [resolvable:$true] %s128
      %134 = dma.vmem_to_hbm [thread:$0]  %s129, 256, %s3, [#allocation4], 128, 128, 8
    $region25: #{tpu_custom_call.1} parent=1 // pred_fallthru
      _
    // Predicated region
    $region26: #{tpu_custom_call.1} parent=1 // pred_check
      _
    $region27: #{tpu_custom_call.1} parent=1 // pred_check_branch
      %136 = sbr.rel (0) target = $region29
    $region28: #{tpu_custom_call.1} parent=1 // pred_region
      %137 = dma.done [#allocation4], 256
    $region29: #{tpu_custom_call.1} parent=1 // pred_fallthru
      _
    %138 = vsyncpa [#allocation3], 1
    %139 = vsyncpa [#allocation6], 1
    %140 = vsyncpa [#allocation4], 1

</llo_original>
